<compile_context>
chip_gen: v5e
topology: v5e:2x2
jax: 0.10.0
libtpu: 0.0.40
codegen_flags: <defaults>
</compile_context>

<pallas_src>
import jax
import jax.numpy as jnp
from jax.experimental import pallas as pl
from jax.experimental.pallas import tpu as pltpu


def attention_kernel(h_ref, w_ref, o_ref):
    # h_ref: (TB, S, H)  slab of TB batch rows (native dtype, f32 or bf16)
    # w_ref: (1, 1, H)   attention weight vector
    # o_ref: (TB, H)     pooled output rows
    h = h_ref[...]                                   # no full-slab upcast; promote per-use
    w = w_ref[...].astype(jnp.float32)               # (1, 1, H), broadcasts implicitly

    # scores[b, s] = <hidden[b, s, :], att_weights>   (VPU mul + XLU lane reduce)
    scores = jnp.sum(h * w, axis=-1, keepdims=True)  # (TB, S, 1) f32

    # Numerically-stable softmax over the sequence axis (PyTorch dim=1).
    m = jnp.max(scores, axis=1, keepdims=True)       # (TB, 1, 1)
    p = jnp.exp(scores - m)                          # (TB, S, 1)
    denom = jnp.sum(p, axis=1, keepdims=True)        # (TB, 1, 1)

    # context[b, :] = sum_s p[b, s] * hidden[b, s, :] (VPU mul + sublane reduce)
    ctx = jnp.sum(h * p, axis=1)                     # (TB, H) f32

    # One exact reciprocal per row instead of H divisions (denom >= 1).
    inv = pl.reciprocal(denom[:, 0, :])              # (TB, 1)
    o_ref[...] = (ctx * inv).astype(o_ref.dtype)


def _vmem_capped_rows(seq, hidden_size, dtype, budget_bytes=12 * 1024 * 1024):
    """Max batch rows per grid step, using lane/sublane-PADDED VMEM layouts."""
    itemsize = jnp.dtype(dtype).itemsize
    lane = 128
    sublane = max(8, 32 // max(itemsize, 1))            # 8 rows (f32) / 16 rows (bf16)
    hid_pad = -(-hidden_size // lane) * lane             # H=32 -> 128 lanes
    row_native = (-(-seq // sublane) * sublane) * hid_pad * itemsize
    row_f32 = (-(-seq // 8) * 8) * hid_pad * 4
    # Resident per batch row: double-buffered input block + ~2 full-slab f32
    # elementwise temps (h*w and h*p products).  Output block is negligible.
    per_row = 2 * row_native + 2 * row_f32
    return max(1, budget_bytes // per_row)


def _pick_block_b(batch, cap):
    """Batch rows per grid step.

    Constraints: <= `cap` (padded-VMEM budget) and either equal to `batch` or a
    multiple of 8 (so the (block_b, H) output block satisfies the (8, 128) rule
    and stores are sublane-dense).  Prefers a divisor of `batch` (avoids a pad
    copy) and >= 4 grid steps (>= 2 per v7x TensorCore) when batch allows it.
    """
    cap = max(1, cap)
    if batch <= cap and batch < 32:
        return batch                              # single block == full dim
    desired = min(cap, max(8, batch // 4))        # aim for >= 4 grid steps
    desired = max(8, (desired // 8) * 8)          # multiple of 8
    if desired >= batch:
        return batch
    b = desired
    while b >= 8:                                 # largest multiple-of-8 divisor
        if batch % b == 0:
            return b
        b -= 8
    return desired                                # no clean divisor -> wrapper pads


def attention_forward(hidden, att_weights, *, block_b=None):
    """hidden: (B, S, H), att_weights: (H, 1) -> (B, H)."""
    batch, seq, hidden_size = hidden.shape
    assert att_weights.shape == (hidden_size, 1)

    if block_b is None:
        cap = _vmem_capped_rows(seq, hidden_size, hidden.dtype)
        block_b = _pick_block_b(batch, cap)

    batch_pad = pl.cdiv(batch, block_b) * block_b
    if batch_pad != batch:
        # Zero rows are harmless (softmax of zeros is uniform, weighted sum = 0).
        # TODO(synk): this full-array pad copy costs an extra HBM read+write; it
        # only triggers when `batch` has no multiple-of-8 divisor <= the VMEM cap.
        hidden = jnp.pad(hidden, ((0, batch_pad - batch), (0, 0), (0, 0)))

    # An (H, 1) column vector is bit-identical to a (1, 1, H) row in row-major order.
    w_row = att_weights.reshape(1, 1, hidden_size)

    out = pl.pallas_call(
        attention_kernel,
        out_shape=jax.ShapeDtypeStruct((batch_pad, hidden_size), hidden.dtype),
        grid_spec=pltpu.PrefetchScalarGridSpec(
            num_scalar_prefetch=0,
            grid=(batch_pad // block_b,),
            in_specs=[
                pl.BlockSpec((block_b, seq, hidden_size), lambda g: (g, 0, 0)),
                pl.BlockSpec((1, 1, hidden_size), lambda g: (0, 0, 0)),
            ],
            out_specs=pl.BlockSpec((block_b, hidden_size), lambda g: (g, 0)),
        ),
        compiler_params=pltpu.CompilerParams(
            dimension_semantics=("parallel",)),
    )(hidden, w_row)

    return out[:batch]


def attention_reference(hidden, att_weights):
    scores = jnp.matmul(hidden.astype(jnp.float32),
                        att_weights.astype(jnp.float32),
                        precision=jax.lax.Precision.HIGHEST)[..., 0]   # (B, S)
    attn = jax.nn.softmax(scores, axis=1)                              # (B, S)
    return jnp.sum(hidden.astype(jnp.float32) * attn[..., None], axis=1)


if __name__ == "__main__":
    key = jax.random.PRNGKey(0)
    k_h, k_w, k_h2 = jax.random.split(key, 3)

    # Demo shapes consistent with the module: batch=8, seq=8, hidden_size=32.
    B, S, H = 8, 8, 32
    hidden = jax.random.normal(k_h, (B, S, H), dtype=jnp.float32)
    # matches nn.init.uniform_(att_weights, -0.1, 0.1), deterministically
    att_weights = jax.random.uniform(
        k_w, (H, 1), dtype=jnp.float32, minval=-0.1, maxval=0.1)

    out = jax.block_until_ready(attention_forward(hidden, att_weights))
    ref = attention_reference(hidden, att_weights)
    assert out.shape == (B, H)
    assert jnp.allclose(out, ref, atol=1e-4, rtol=1e-4), "mismatch vs reference (f32)"

    # Exercise the multi-block (tiled) path too: B=64 -> block_b=16, 4 grid steps.
    B2 = 64
    hidden2 = jax.random.normal(k_h2, (B2, S, H), dtype=jnp.float32)
    out2 = jax.block_until_ready(attention_forward(hidden2, att_weights))
    ref2 = attention_reference(hidden2, att_weights)
    assert out2.shape == (B2, H)
    assert jnp.allclose(out2, ref2, atol=1e-4, rtol=1e-4), "mismatch vs reference (tiled)"

    # bf16 input path (halves HBM traffic; f32 accumulation inside the kernel).
    hidden_bf16 = hidden2.astype(jnp.bfloat16)
    out3 = jax.block_until_ready(attention_forward(hidden_bf16, att_weights))
    ref3 = attention_reference(hidden_bf16, att_weights)
    assert out3.shape == (B2, H)
    assert jnp.allclose(out3.astype(jnp.float32), ref3, atol=3e-2, rtol=3e-2), \
        "mismatch vs reference (bf16)"

    print("KERNEL_OK")
</pallas_src>

<mosaic_0001>
module attributes {stable_mosaic.version = 11 : i64} {
  func.func @attention_kernel(%arg0: i32, %arg1: memref<8x8x32xf32, #tpu.memory_space<vmem>>, %arg2: memref<1x1x32xf32, #tpu.memory_space<vmem>>, %arg3: memref<8x32xf32, #tpu.memory_space<vmem>>) attributes {dimension_semantics = [#tpu.dimension_semantics<parallel>], iteration_bounds = array<i64: 1>, scalar_prefetch = 0 : i64, scratch_operands = 0 : i64, tpu.core_type = #tpu.core_type<tc>, window_params = [{transform_indices = @transform_0, window_bounds = array<i64: 8, 8, 32>}, {pipeline_mode = #tpu.pipeline_mode<synchronous>, transform_indices = @transform_1, window_bounds = array<i64: 1, 1, 32>}, {transform_indices = @transform_2, window_bounds = array<i64: 8, 32>}]} {
    %c0 = arith.constant 0 : index
    %c0_0 = arith.constant 0 : index
    %c0_1 = arith.constant 0 : index
    %0 = vector.load %arg1[%c0, %c0_0, %c0_1] : memref<8x8x32xf32, #tpu.memory_space<vmem>>, vector<8x8x32xf32>
    %c0_2 = arith.constant 0 : index
    %c0_3 = arith.constant 0 : index
    %c0_4 = arith.constant 0 : index
    %1 = vector.load %arg2[%c0_2, %c0_3, %c0_4] : memref<1x1x32xf32, #tpu.memory_space<vmem>>, vector<1x1x32xf32>
    %2 = vector.broadcast %1 : vector<1x1x32xf32> to vector<8x8x32xf32>
    %3 = arith.mulf %0, %2 : vector<8x8x32xf32>
    %cst = arith.constant dense<0.000000e+00> : vector<8x8xf32>
    %4 = vector.multi_reduction <add>, %3, %cst [2] : vector<8x8x32xf32> to vector<8x8xf32>
    %5 = vector.shape_cast %4 : vector<8x8xf32> to vector<8x8x1xf32>
    %cst_5 = arith.constant dense<0xFF800000> : vector<8x1xf32>
    %6 = vector.multi_reduction <maximumf>, %5, %cst_5 [1] : vector<8x8x1xf32> to vector<8x1xf32>
    %7 = vector.shape_cast %6 : vector<8x1xf32> to vector<8x1x1xf32>
    %8 = vector.broadcast %7 : vector<8x1x1xf32> to vector<8x8x1xf32>
    %9 = arith.subf %5, %8 : vector<8x8x1xf32>
    %10 = math.exp %9 : vector<8x8x1xf32>
    %cst_6 = arith.constant dense<0.000000e+00> : vector<8x1xf32>
    %11 = vector.multi_reduction <add>, %10, %cst_6 [1] : vector<8x8x1xf32> to vector<8x1xf32>
    %12 = vector.shape_cast %11 : vector<8x1xf32> to vector<8x1x1xf32>
    %13 = vector.broadcast %10 : vector<8x8x1xf32> to vector<8x8x32xf32>
    %14 = arith.mulf %0, %13 : vector<8x8x32xf32>
    %cst_7 = arith.constant dense<0.000000e+00> : vector<8x32xf32>
    %15 = vector.multi_reduction <add>, %14, %cst_7 [1] : vector<8x8x32xf32> to vector<8x32xf32>
    %16 = vector.shape_cast %12 : vector<8x1x1xf32> to vector<8x1xf32>
    %17 = tpu.reciprocal %16 : vector<8x1xf32> -> vector<8x1xf32>
    %18 = vector.broadcast %17 : vector<8x1xf32> to vector<8x32xf32>
    %19 = arith.mulf %15, %18 : vector<8x32xf32>
    %c0_8 = arith.constant 0 : index
    %c0_9 = arith.constant 0 : index
    %20 = vector.load %arg3[%c0_8, %c0_9] : memref<8x32xf32, #tpu.memory_space<vmem>>, vector<8x32xf32>
    tpu.vector_store %arg3[%c0_8, %c0_9], %19 {strides = array<i32>} : memref<8x32xf32, #tpu.memory_space<vmem>>, vector<8x32xf32>,
    return
  }
  func.func @transform_0(%arg0: i32) -> (i32, i32, i32) {
    %c0_i32 = arith.constant 0 : i32
    %c0_i32_0 = arith.constant 0 : i32
    %c0_i32_1 = arith.constant 0 : i32
    return %arg0, %c0_i32, %c0_i32_0 : i32, i32, i32
  }
  func.func @transform_1(%arg0: i32) -> (i32, i32, i32) {
    %c0_i32 = arith.constant 0 : i32
    %c0_i32_0 = arith.constant 0 : i32
    %c0_i32_1 = arith.constant 0 : i32
    %c0_i32_2 = arith.constant 0 : i32
    return %c0_i32, %c0_i32_0, %c0_i32_1 : i32, i32, i32
  }
  func.func @transform_2(%arg0: i32) -> (i32, i32) {
    %c0_i32 = arith.constant 0 : i32
    %c0_i32_0 = arith.constant 0 : i32
    return %arg0, %c0_i32 : i32, i32
  }
}

</mosaic_0001>

<llo_original>
// kernel: tpu_custom_call.1
$region0: #{tpu_custom_call.1}
  #allocation0 [shape = 'u32[]', space=smem, size = 0x4, offset = 0x4, fixed_abs, tag = 'smem constant byte address 0x4 - core index']
  #allocation1 [shape = 'u32[72,128]{1,0:T(1,128)}', space=vmem, size = 0x9000, scoped, tag = 'internal scratch']
  %s0 = inlined_call_operand.hbm [shape: f32[8,8,32], index: 0, kind: input, shape index: {}]
  %s1 = inlined_call_operand.hbm [shape: f32[1,1,32], index: 1, kind: input, shape index: {}]
  %s2 = inlined_call_operand.hbm [shape: f32[8,32], index: 2, kind: output, shape index: {}]
  %s3 = sld [smem:[#allocation0]]
  $region26: #{tpu_custom_call.1} parent=0
    _
  %s5 = ssub.s32 1, %s3
  %s6 = scalar_select 0, %s5, %s3
  $region1: #{tpu_custom_call.1} parent=0
    #allocation2 [shape = 'u8[32768]{0}', space=vmem, size = 0x8000, scoped, tag = 'input window, operand 0, single buffered']
    #allocation3 [shape = 's32[1]{0}', space=sflag, size = 0x4, scoped, tag = 'scoped memory for tpu_custom_call.1']
    #allocation4 [shape = 's32[1]{0}', space=sflag, size = 0x4, scoped, tag = 'scoped memory for tpu_custom_call.1']
    #allocation5 [shape = 'u8[512]{0}', space=vmem, size = 0x400, scoped, tag = 'input window, operand 1, single buffered']
    #allocation6 [shape = 's32[1]{0}', space=sflag, size = 0x4, scoped, tag = 'scoped memory for tpu_custom_call.1']
    #allocation7 [shape = 'u8[4096]{0}', space=vmem, size = 0x1000, scoped, tag = 'output window, operand 0, single buffered']
    %7 = vsyncpa [#allocation3], 0
    %8 = vsyncpa [#allocation6], 0
    %9 = vsyncpa [#allocation4], 0
    // Predicated region
    $region2: #{tpu_custom_call.1} parent=1 // pred_check
      _
    $region3: #{tpu_custom_call.1} parent=1 // pred_check_branch
      %11 = sbr.rel (0) target = $region5
    $region4: #{tpu_custom_call.1} parent=1 // pred_region
      %13 = vsyncadd [#allocation3], 0
      %s14 = sshll.u32 %s0, 4
      %s15 = int_to_ptr.hbm [resolvable:$true] %s14
      %s16 = sshll.u32 [#allocation2], 4
      %s17 = int_to_ptr.vmem [resolvable:$true] %s16
      %22 = dma.hbm_to_vmem [thread:$0]  %s15, 1024, %s17, [#allocation3], 128, 128, 8
    $region5: #{tpu_custom_call.1} parent=1 // pred_fallthru
      _
    // Predicated region
    $region6: #{tpu_custom_call.1} parent=1 // pred_check
      _
    $region7: #{tpu_custom_call.1} parent=1 // pred_check_branch
      %24 = sbr.rel (0) target = $region9
    $region8: #{tpu_custom_call.1} parent=1 // pred_region
      %26 = vsyncadd [#allocation6], 0
      %s28 = sshll.u32 %s1, 4
      %s29 = int_to_ptr.hbm [resolvable:$true] %s28
      %s30 = sshll.u32 [#allocation5], 4
      %s31 = int_to_ptr.vmem [resolvable:$true] %s30
      %33 = dma.hbm_to_vmem [thread:$0]  %s29, 16, %s31, [#allocation6]
    $region9: #{tpu_custom_call.1} parent=1 // pred_fallthru
      _
    // Predicated region
    $region10: #{tpu_custom_call.1} parent=1 // pred_check
      _
    $region11: #{tpu_custom_call.1} parent=1 // pred_check_branch
      %35 = sbr.rel (0) target = $region13
    $region12: #{tpu_custom_call.1} parent=1 // pred_region
      %37 = dma.done [#allocation3], 1024
    $region13: #{tpu_custom_call.1} parent=1 // pred_fallthru
      _
    // Predicated region
    $region14: #{tpu_custom_call.1} parent=1 // pred_check
      _
    $region15: #{tpu_custom_call.1} parent=1 // pred_check_branch
      %39 = sbr.rel (0) target = $region17
    $region16: #{tpu_custom_call.1} parent=1 // pred_region
      %41 = dma.done [#allocation6], 16
    $region17: #{tpu_custom_call.1} parent=1 // pred_fallthru
      _
    %v42 = vld [vmem:[#allocation2] sm:$0xff]
    %v43 = vld [vmem:[#allocation2 + $0x8] sm:$0xff]
    %v44 = vld [vmem:[#allocation2 + $0x10] sm:$0xff]
    %v45 = vld [vmem:[#allocation2 + $0x18] sm:$0xff]
    %v46 = vld [vmem:[#allocation2 + $0x20] sm:$0xff]
    %v47 = vld [vmem:[#allocation2 + $0x28] sm:$0xff]
    %v48 = vld [vmem:[#allocation2 + $0x30] sm:$0xff]
    %v49 = vld [vmem:[#allocation2 + $0x38] sm:$0xff]
    %v50 = vld [vmem:[#allocation5] sm:$0x1]
    %v52 = vperm.slane %v50, 0
    %v54 = vmul.f32 %v42, %v52
    %v55 = vmul.f32 %v43, %v52
    %v56 = vmul.f32 %v44, %v52
    %v57 = vmul.f32 %v45, %v52
    %v58 = vmul.f32 %v46, %v52
    %v59 = vmul.f32 %v47, %v52
    %v60 = vmul.f32 %v48, %v52
    %v61 = vmul.f32 %v49, %v52
    %vm62 = vcmask 261120
    %v63 = vsel %vm62, %v54, 0.0
    %64 = vadd.xlane.f32.xlu0 %v63
    %v65 = vpop.xlane.xlu0 %64
    %v66 = vsel %vm62, %v55, 0.0
    %67 = vadd.xlane.f32.xlu0 %v66
    %v68 = vpop.xlane.xlu0 %67
    %v69 = vsel %vm62, %v56, 0.0
    %70 = vadd.xlane.f32.xlu0 %v69
    %v71 = vpop.xlane.xlu0 %70
    %v72 = vsel %vm62, %v57, 0.0
    %73 = vadd.xlane.f32.xlu0 %v72
    %v74 = vpop.xlane.xlu0 %73
    %v75 = vsel %vm62, %v58, 0.0
    %76 = vadd.xlane.f32.xlu0 %v75
    %v77 = vpop.xlane.xlu0 %76
    %v78 = vsel %vm62, %v59, 0.0
    %79 = vadd.xlane.f32.xlu0 %v78
    %v80 = vpop.xlane.xlu0 %79
    %v81 = vsel %vm62, %v60, 0.0
    %82 = vadd.xlane.f32.xlu0 %v81
    %v83 = vpop.xlane.xlu0 %82
    %v84 = vsel %vm62, %v61, 0.0
    %85 = vadd.xlane.f32.xlu0 %v84
    %v86 = vpop.xlane.xlu0 %85
    %v87 = vrot.slane %v65, 4
    %v88 = vmax.f32 %v65, %v87
    %v89 = vrot.slane %v88, 2
    %v90 = vmax.f32 %v88, %v89
    %v91 = vrot.slane %v90, 1
    %v92 = vmax.f32 %v90, %v91
    %v93 = vrot.slane %v68, 4
    %v94 = vmax.f32 %v68, %v93
    %v95 = vrot.slane %v94, 2
    %v96 = vmax.f32 %v94, %v95
    %v97 = vrot.slane %v96, 1
    %v98 = vmax.f32 %v96, %v97
    %v99 = vrot.slane %v71, 4
    %v100 = vmax.f32 %v71, %v99
    %v101 = vrot.slane %v100, 2
    %v102 = vmax.f32 %v100, %v101
    %v103 = vrot.slane %v102, 1
    %v104 = vmax.f32 %v102, %v103
    %v105 = vrot.slane %v74, 4
    %v106 = vmax.f32 %v74, %v105
    %v107 = vrot.slane %v106, 2
    %v108 = vmax.f32 %v106, %v107
    %v109 = vrot.slane %v108, 1
    %v110 = vmax.f32 %v108, %v109
    %v111 = vrot.slane %v77, 4
    %v112 = vmax.f32 %v77, %v111
    %v113 = vrot.slane %v112, 2
    %v114 = vmax.f32 %v112, %v113
    %v115 = vrot.slane %v114, 1
    %v116 = vmax.f32 %v114, %v115
    %v117 = vrot.slane %v80, 4
    %v118 = vmax.f32 %v80, %v117
    %v119 = vrot.slane %v118, 2
    %v120 = vmax.f32 %v118, %v119
    %v121 = vrot.slane %v120, 1
    %v122 = vmax.f32 %v120, %v121
    %v123 = vrot.slane %v83, 4
    %v124 = vmax.f32 %v83, %v123
    %v125 = vrot.slane %v124, 2
    %v126 = vmax.f32 %v124, %v125
    %v127 = vrot.slane %v126, 1
    %v128 = vmax.f32 %v126, %v127
    %v129 = vrot.slane %v86, 4
    %v130 = vmax.f32 %v86, %v129
    %v131 = vrot.slane %v130, 2
    %v132 = vmax.f32 %v130, %v131
    %v133 = vrot.slane %v132, 1
    %v134 = vmax.f32 %v132, %v133
    %v135 = vsub.f32 %v65, %v92
    %v136 = vsub.f32 %v68, %v98
    %v137 = vsub.f32 %v71, %v104
    %v138 = vsub.f32 %v74, %v110
    %v139 = vsub.f32 %v77, %v116
    %v140 = vsub.f32 %v80, %v122
    %v141 = vsub.f32 %v83, %v128
    %v142 = vsub.f32 %v86, %v134
    %v143 = vmul.f32 %v135, 1.442695
    %v144 = vpow.pop %v143
    %v145 = vmul.f32 %v136, 1.442695
    %v146 = vpow.pop %v145
    %v147 = vmul.f32 %v137, 1.442695
    %v148 = vpow.pop %v147
    %v149 = vmul.f32 %v138, 1.442695
    %v150 = vpow.pop %v149
    %v151 = vmul.f32 %v139, 1.442695
    %v152 = vpow.pop %v151
    %v153 = vmul.f32 %v140, 1.442695
    %v154 = vpow.pop %v153
    %v155 = vmul.f32 %v141, 1.442695
    %v156 = vpow.pop %v155
    %v157 = vmul.f32 %v142, 1.442695
    %v158 = vpow.pop %v157
    %v159 = vrot.slane %v144, 4
    %v160 = vadd.f32 %v144, %v159
    %v161 = vrot.slane %v160, 2
    %v162 = vadd.f32 %v160, %v161
    %v163 = vrot.slane %v162, 1
    %v164 = vadd.f32 %v162, %v163
    %v165 = vrot.slane %v146, 4
    %v166 = vadd.f32 %v146, %v165
    %v167 = vrot.slane %v166, 2
    %v168 = vadd.f32 %v166, %v167
    %v169 = vrot.slane %v168, 1
    %v170 = vadd.f32 %v168, %v169
    %v171 = vrot.slane %v148, 4
    %v172 = vadd.f32 %v148, %v171
    %v173 = vrot.slane %v172, 2
    %v174 = vadd.f32 %v172, %v173
    %v175 = vrot.slane %v174, 1
    %v176 = vadd.f32 %v174, %v175
    %v177 = vrot.slane %v150, 4
    %v178 = vadd.f32 %v150, %v177
    %v179 = vrot.slane %v178, 2
    %v180 = vadd.f32 %v178, %v179
    %v181 = vrot.slane %v180, 1
    %v182 = vadd.f32 %v180, %v181
    %v183 = vrot.slane %v152, 4
    %v184 = vadd.f32 %v152, %v183
    %v185 = vrot.slane %v184, 2
    %v186 = vadd.f32 %v184, %v185
    %v187 = vrot.slane %v186, 1
    %v188 = vadd.f32 %v186, %v187
    %v189 = vrot.slane %v154, 4
    %v190 = vadd.f32 %v154, %v189
    %v191 = vrot.slane %v190, 2
    %v192 = vadd.f32 %v190, %v191
    %v193 = vrot.slane %v192, 1
    %v194 = vadd.f32 %v192, %v193
    %v195 = vrot.slane %v156, 4
    %v196 = vadd.f32 %v156, %v195
    %v197 = vrot.slane %v196, 2
    %v198 = vadd.f32 %v196, %v197
    %v199 = vrot.slane %v198, 1
    %v200 = vadd.f32 %v198, %v199
    %v201 = vrot.slane %v158, 4
    %v202 = vadd.f32 %v158, %v201
    %v203 = vrot.slane %v202, 2
    %v204 = vadd.f32 %v202, %v203
    %v205 = vrot.slane %v204, 1
    %v206 = vadd.f32 %v204, %v205
    %v207 = vmul.f32 %v42, %v144
    %v208 = vmul.f32 %v43, %v146
    %v209 = vmul.f32 %v44, %v148
    %v210 = vmul.f32 %v45, %v150
    %v211 = vmul.f32 %v46, %v152
    %v212 = vmul.f32 %v47, %v154
    %v213 = vmul.f32 %v48, %v156
    %v214 = vmul.f32 %v49, %v158
    %v215 = vsel %vm62, %v207, 0.0
    %v216 = vrot.slane %v215, 4
    %v217 = vadd.f32 %v215, %v216
    %v218 = vrot.slane %v217, 2
    %v219 = vadd.f32 %v217, %v218
    %v220 = vrot.slane %v219, 1
    %v221 = vadd.f32 %v219, %v220
    %v222 = vsel %vm62, %v208, 0.0
    %v223 = vrot.slane %v222, 4
    %v224 = vadd.f32 %v222, %v223
    %v225 = vrot.slane %v224, 2
    %v226 = vadd.f32 %v224, %v225
    %v227 = vrot.slane %v226, 1
    %v228 = vadd.f32 %v226, %v227
    %v229 = vsel %vm62, %v209, 0.0
    %v230 = vrot.slane %v229, 4
    %v231 = vadd.f32 %v229, %v230
    %v232 = vrot.slane %v231, 2
    %v233 = vadd.f32 %v231, %v232
    %v234 = vrot.slane %v233, 1
    %v235 = vadd.f32 %v233, %v234
    %v236 = vsel %vm62, %v210, 0.0
    %v237 = vrot.slane %v236, 4
    %v238 = vadd.f32 %v236, %v237
    %v239 = vrot.slane %v238, 2
    %v240 = vadd.f32 %v238, %v239
    %v241 = vrot.slane %v240, 1
    %v242 = vadd.f32 %v240, %v241
    %v243 = vsel %vm62, %v211, 0.0
    %v244 = vrot.slane %v243, 4
    %v245 = vadd.f32 %v243, %v244
    %v246 = vrot.slane %v245, 2
    %v247 = vadd.f32 %v245, %v246
    %v248 = vrot.slane %v247, 1
    %v249 = vadd.f32 %v247, %v248
    %v250 = vsel %vm62, %v212, 0.0
    %v251 = vrot.slane %v250, 4
    %v252 = vadd.f32 %v250, %v251
    %v253 = vrot.slane %v252, 2
    %v254 = vadd.f32 %v252, %v253
    %v255 = vrot.slane %v254, 1
    %v256 = vadd.f32 %v254, %v255
    %v257 = vsel %vm62, %v213, 0.0
    %v258 = vrot.slane %v257, 4
    %v259 = vadd.f32 %v257, %v258
    %v260 = vrot.slane %v259, 2
    %v261 = vadd.f32 %v259, %v260
    %v262 = vrot.slane %v261, 1
    %v263 = vadd.f32 %v261, %v262
    %v264 = vsel %vm62, %v214, 0.0
    %v265 = vrot.slane %v264, 4
    %v266 = vadd.f32 %v264, %v265
    %v267 = vrot.slane %v266, 2
    %v268 = vadd.f32 %v266, %v267
    %v269 = vrot.slane %v268, 1
    %v270 = vadd.f32 %v268, %v269
    %v271 = vrcp.pop %v164
    %v272 = vmul.f32 %v164, %v271
    %v273 = vsub.f32 1.0, %v272
    %v274 = vmul.f32 %v271, %v273
    %v275 = vadd.f32 %v271, %v274
    %vm276 = vweird.f32 %v164
    %vm277 = vweird.f32 %v271
    %vm278 = vmor %vm276, %vm277
    %v279 = vsel %vm278, %v271, %v275
    %v280 = vand.u32 2147483647, %v164
    %vm281 = vcmp.eq.f32.partialorder %v280, 8.507059e+37
    %v282 = vand.u32 %v164, 2147483648
    %v283 = vor.u32 1.1754944e-38, %v282
    %v284 = vsel %vm281, %v283, %v279
    %v285 = vrcp.pop %v170
    %v286 = vmul.f32 %v170, %v285
    %v287 = vsub.f32 1.0, %v286
    %v288 = vmul.f32 %v285, %v287
    %v289 = vadd.f32 %v285, %v288
    %vm290 = vweird.f32 %v170
    %vm291 = vweird.f32 %v285
    %vm292 = vmor %vm290, %vm291
    %v293 = vsel %vm292, %v285, %v289
    %v294 = vand.u32 2147483647, %v170
    %vm295 = vcmp.eq.f32.partialorder %v294, 8.507059e+37
    %v296 = vand.u32 %v170, 2147483648
    %v297 = vor.u32 1.1754944e-38, %v296
    %v298 = vsel %vm295, %v297, %v293
    %v299 = vrcp.pop %v176
    %v300 = vmul.f32 %v176, %v299
    %v301 = vsub.f32 1.0, %v300
    %v302 = vmul.f32 %v299, %v301
    %v303 = vadd.f32 %v299, %v302
    %vm304 = vweird.f32 %v176
    %vm305 = vweird.f32 %v299
    %vm306 = vmor %vm304, %vm305
    %v307 = vsel %vm306, %v299, %v303
    %v308 = vand.u32 2147483647, %v176
    %vm309 = vcmp.eq.f32.partialorder %v308, 8.507059e+37
    %v310 = vand.u32 %v176, 2147483648
    %v311 = vor.u32 1.1754944e-38, %v310
    %v312 = vsel %vm309, %v311, %v307
    %v313 = vrcp.pop %v182
    %v314 = vmul.f32 %v182, %v313
    %v315 = vsub.f32 1.0, %v314
    %v316 = vmul.f32 %v313, %v315
    %v317 = vadd.f32 %v313, %v316
    %vm318 = vweird.f32 %v182
    %vm319 = vweird.f32 %v313
    %vm320 = vmor %vm318, %vm319
    %v321 = vsel %vm320, %v313, %v317
    %v322 = vand.u32 2147483647, %v182
    %vm323 = vcmp.eq.f32.partialorder %v322, 8.507059e+37
    %v324 = vand.u32 %v182, 2147483648
    %v325 = vor.u32 1.1754944e-38, %v324
    %v326 = vsel %vm323, %v325, %v321
    %v327 = vrcp.pop %v188
    %v328 = vmul.f32 %v188, %v327
    %v329 = vsub.f32 1.0, %v328
    %v330 = vmul.f32 %v327, %v329
    %v331 = vadd.f32 %v327, %v330
    %vm332 = vweird.f32 %v188
    %vm333 = vweird.f32 %v327
    %vm334 = vmor %vm332, %vm333
    %v335 = vsel %vm334, %v327, %v331
    %v336 = vand.u32 2147483647, %v188
    %vm337 = vcmp.eq.f32.partialorder %v336, 8.507059e+37
    %v338 = vand.u32 %v188, 2147483648
    %v339 = vor.u32 1.1754944e-38, %v338
    %v340 = vsel %vm337, %v339, %v335
    %v341 = vrcp.pop %v194
    %v342 = vmul.f32 %v194, %v341
    %v343 = vsub.f32 1.0, %v342
    %v344 = vmul.f32 %v341, %v343
    %v345 = vadd.f32 %v341, %v344
    %vm346 = vweird.f32 %v194
    %vm347 = vweird.f32 %v341
    %vm348 = vmor %vm346, %vm347
    %v349 = vsel %vm348, %v341, %v345
    %v350 = vand.u32 2147483647, %v194
    %vm351 = vcmp.eq.f32.partialorder %v350, 8.507059e+37
    %v352 = vand.u32 %v194, 2147483648
    %v353 = vor.u32 1.1754944e-38, %v352
    %v354 = vsel %vm351, %v353, %v349
    %v355 = vrcp.pop %v200
    %v356 = vmul.f32 %v200, %v355
    %v357 = vsub.f32 1.0, %v356
    %v358 = vmul.f32 %v355, %v357
    %v359 = vadd.f32 %v355, %v358
    %vm360 = vweird.f32 %v200
    %vm361 = vweird.f32 %v355
    %vm362 = vmor %vm360, %vm361
    %v363 = vsel %vm362, %v355, %v359
    %v364 = vand.u32 2147483647, %v200
    %vm365 = vcmp.eq.f32.partialorder %v364, 8.507059e+37
    %v366 = vand.u32 %v200, 2147483648
    %v367 = vor.u32 1.1754944e-38, %v366
    %v368 = vsel %vm365, %v367, %v363
    %v369 = vrcp.pop %v206
    %v370 = vmul.f32 %v206, %v369
    %v371 = vsub.f32 1.0, %v370
    %v372 = vmul.f32 %v369, %v371
    %v373 = vadd.f32 %v369, %v372
    %vm374 = vweird.f32 %v206
    %vm375 = vweird.f32 %v369
    %vm376 = vmor %vm374, %vm375
    %v377 = vsel %vm376, %v369, %v373
    %v378 = vand.u32 2147483647, %v206
    %vm379 = vcmp.eq.f32.partialorder %v378, 8.507059e+37
    %v380 = vand.u32 %v206, 2147483648
    %v381 = vor.u32 1.1754944e-38, %v380
    %v382 = vsel %vm379, %v381, %v377
    %v383 = vmul.f32 %v221, %v284
    %v384 = vmul.f32 %v228, %v298
    %v385 = vmul.f32 %v235, %v312
    %v386 = vmul.f32 %v242, %v326
    %v387 = vmul.f32 %v249, %v340
    %v388 = vmul.f32 %v256, %v354
    %v389 = vmul.f32 %v263, %v368
    %v390 = vmul.f32 %v270, %v382
    %vm399 = vcmask 1041409
    %v400 = vsel %vm399, %v384, %v383
    %vm401 = vcmask 1042434
    %v402 = vsel %vm401, %v385, %v400
    %vm403 = vcmask 1043459
    %v404 = vsel %vm403, %v386, %v402
    %vm405 = vcmask 1044484
    %v406 = vsel %vm405, %v387, %v404
    %vm407 = vcmask 1045509
    %v408 = vsel %vm407, %v388, %v406
    %vm409 = vcmask 1046534
    %v410 = vsel %vm409, %v389, %v408
    %vm411 = vcmask 1047559
    %v412 = vsel %vm411, %v390, %v410
    %414 = vst.msk [vmem:[#allocation7] sm:$0xff] %vm62, %v412
    // Predicated region
    $region18: #{tpu_custom_call.1} parent=1 // pred_check
      _
    $region19: #{tpu_custom_call.1} parent=1 // pred_check_branch
      %416 = sbr.rel (0) target = $region21
    $region20: #{tpu_custom_call.1} parent=1 // pred_region
      %418 = vsyncadd [#allocation4], 0
      %s420 = sshll.u32 [#allocation7], 4
      %s421 = int_to_ptr.vmem [resolvable:$true] %s420
      %s422 = sshll.u32 %s2, 4
      %s423 = int_to_ptr.hbm [resolvable:$true] %s422
      %425 = dma.vmem_to_hbm [thread:$0]  %s421, 128, %s423, [#allocation4]
    $region21: #{tpu_custom_call.1} parent=1 // pred_fallthru
      _
    // Predicated region
    $region22: #{tpu_custom_call.1} parent=1 // pred_check
      _
    $region23: #{tpu_custom_call.1} parent=1 // pred_check_branch
      %427 = sbr.rel (0) target = $region25
    $region24: #{tpu_custom_call.1} parent=1 // pred_region
      %429 = dma.done [#allocation4], 128
    $region25: #{tpu_custom_call.1} parent=1 // pred_fallthru
      _
    %430 = vsyncpa [#allocation3], 1
    %431 = vsyncpa [#allocation6], 1
    %432 = vsyncpa [#allocation4], 1

</llo_original>
